<compile_context>
chip_gen: v7x
topology: tpu7x:2x2x1
jax: 0.10.0
libtpu: 0.0.40
codegen_flags: <defaults>
</compile_context>

<pallas_src>
import functools
import math

import jax
import jax.numpy as jnp
from jax import lax
from jax.experimental import pallas as pl
from jax.experimental.pallas import tpu as pltpu

LANE = 128
SUB = 8
_UNROLL_FLOW_MAX = 8


def _round_up(x, m):
    return ((x + m - 1) // m) * m


def _cdiv(a, b):
    return (a + b - 1) // b


def _vmem_capacity_bytes():
    try:
        return int(pltpu.get_tpu_info().vmem_capacity_bytes)
    except Exception:
        return 128 * 1024 * 1024  # v5e/v6e default


def _make_resident_kernel(n_flow, n_layers, unroll_flows):
    """One grid step per batch tile; all stacked flow weights resident in VMEM.

    refs = [x_ref, (w_ref, b_ref) * n_layers, out_ref]
      x_ref:  (TB, D_pad)                 fp32
      w_ref:  (n_flow, d_in_p, d_out_p)   bf16  (stacked over flows)
      b_ref:  (n_flow, 1, d_out_p)        fp32
      out_ref:(TB, D_pad)                 fp32
    """

    def kernel(*refs):
        x_ref = refs[0]
        wb = refs[1:1 + 2 * n_layers]
        o_ref = refs[1 + 2 * n_layers]

        def one_flow(f, x):
            h = x
            for layer in range(n_layers):
                w = wb[2 * layer][f]            # (d_in_p, d_out_p) bf16
                b = wb[2 * layer + 1][f]        # (1, d_out_p) fp32
                # bf16 MXU matmul, fp32 accumulation; elementwise stays fp32.
                h = jnp.dot(h.astype(w.dtype), w,
                            preferred_element_type=jnp.float32) + b
                if layer < n_layers - 1:
                    h = jnp.maximum(h, 0.0)     # relu on hidden layers
            return x + h                        # residual: x <- x + v(x)

        x = x_ref[...].astype(jnp.float32)
        if unroll_flows:
            for f in range(n_flow):             # static unroll (small n_flow)
                x = one_flow(f, x)
        else:
            x = lax.fori_loop(0, n_flow, one_flow, x)
        o_ref[...] = x.astype(o_ref.dtype)

    return kernel


def _make_streamed_kernel(n_layers):
    """grid=(batch_tiles, n_flow); x carried across flows in a VMEM scratch.

    refs = [x_ref, (w_ref, b_ref) * n_layers, out_ref, acc_ref]
      w_ref: (1, d_in_p, d_out_p) bf16 (per-flow block, double-buffered by the pipeline)
    """

    def kernel(*refs):
        x_ref = refs[0]
        wb = refs[1:1 + 2 * n_layers]
        o_ref = refs[1 + 2 * n_layers]
        acc_ref = refs[2 + 2 * n_layers]
        f = pl.program_id(1)

        @pl.when(f == 0)
        def _():
            acc_ref[...] = x_ref[...].astype(jnp.float32)

        h = acc_ref[...]
        for layer in range(n_layers):
            w = wb[2 * layer][0]
            b = wb[2 * layer + 1][0]
            h = jnp.dot(h.astype(w.dtype), w,
                        preferred_element_type=jnp.float32) + b
            if layer < n_layers - 1:
                h = jnp.maximum(h, 0.0)
        acc_ref[...] = acc_ref[...] + h

        @pl.when(f == pl.num_programs(1) - 1)
        def _():
            o_ref[...] = acc_ref[...].astype(o_ref.dtype)

    return kernel


def init_flownet_params(key, input_dim, n_flow, l_hidden):
    """PyTorch-Linear-style init; weights stored in bf16, biases in fp32.

    Returns a list of (W, b) pairs, one per MLP layer, stacked across flows:
      W_k: (n_flow, d_in_k, d_out_k) bf16, b_k: (n_flow, 1, d_out_k) fp32
    """
    dims = [input_dim] + list(l_hidden) + [input_dim]
    params = []
    for k in range(len(dims) - 1):
        d_in, d_out = dims[k], dims[k + 1]
        key, kw, kb = jax.random.split(key, 3)
        bound = 1.0 / math.sqrt(d_in)
        w = jax.random.uniform(kw, (n_flow, d_in, d_out), jnp.float32,
                               -bound, bound).astype(jnp.bfloat16)
        b = jax.random.uniform(kb, (n_flow, 1, d_out), jnp.float32, -bound, bound)
        params.append((w, b))
    return params


@functools.partial(jax.jit, static_argnames=("force_streamed",))
def flownet_forward(x, params, force_streamed=False):
    """x: (B, input_dim) float32 -> (B, input_dim) float32."""
    B, D = x.shape
    n_layers = len(params)
    n_flow = params[0][0].shape[0]

    # ---- generation-aware VMEM budget --------------------------------------
    vmem_cap_phys = _vmem_capacity_bytes()
    vmem_cap = int(0.80 * vmem_cap_phys)             # ~51 MiB v7x, ~102 MiB v5e/v6e
    small_vmem = vmem_cap_phys <= 96 * 1024 * 1024   # v7x-like (64 MiB, 2 TCs)

    # ---- feature padding & balanced batch tiling ---------------------------
    D_pad = _round_up(D, LANE)
    B_pad0 = _round_up(B, SUB)
    tb_cap = 256 if small_vmem else 512
    n_btiles = max(1, _cdiv(B_pad0, tb_cap))
    if small_vmem and B_pad0 >= 16:
        n_btiles = max(n_btiles, 2)                  # engage both v7x TensorCores
    TB = _round_up(_cdiv(B_pad0, n_btiles), SUB)
    B_pad = n_btiles * TB

    x_p = jnp.pad(x.astype(jnp.float32), ((0, B_pad - B), (0, D_pad - D)))

    # ---- pad & stack weights; footprint / cost accounting ------------------
    padded = []
    stacked_w_bytes = 0       # all flows, single-buffered (resident path)
    per_flow_w_bytes = 0      # one flow (streamed path)
    act_width = D_pad
    flops = 0
    for (w, b) in params:
        nf, d_in, d_out = w.shape
        d_in_p = _round_up(d_in, LANE)
        d_out_p = _round_up(d_out, LANE)
        w_p = jnp.pad(w, ((0, 0), (0, d_in_p - d_in), (0, d_out_p - d_out)))
        b_p = jnp.pad(b.astype(jnp.float32), ((0, 0), (0, 0), (0, d_out_p - d_out)))
        padded.append((w_p, b_p))
        stacked_w_bytes += nf * d_in_p * d_out_p * 2 + nf * d_out_p * 4
        per_flow_w_bytes += d_in_p * d_out_p * 2 + d_out_p * 4
        act_width = max(act_width, d_out_p)
        flops += 2 * B_pad * d_in_p * d_out_p * nf

    io_tile_bytes = 2 * TB * D_pad * 4               # x + out tile, fp32
    resident_needed = (stacked_w_bytes               # weight slabs, single-buffered
                       + 2 * io_tile_bytes           # double-buffered x / out tiles
                       + 2 * TB * act_width * 4)     # live-activation headroom
    streamed_needed = (2 * per_flow_w_bytes          # double-buffered per-flow weights
                       + 2 * io_tile_bytes
                       + TB * D_pad * 4              # x accumulator scratch
                       + 2 * TB * act_width * 4)

    use_resident = (not force_streamed) and (resident_needed <= vmem_cap)
    vmem_needed = resident_needed if use_resident else streamed_needed
    vmem_limit = int(min(vmem_cap, max(int(1.25 * vmem_needed), 16 * 1024 * 1024)))

    weight_hbm = stacked_w_bytes if use_resident else stacked_w_bytes * n_btiles
    cost = pl.CostEstimate(flops=flops, transcendentals=0,
                           bytes_accessed=weight_hbm + 2 * B_pad * D_pad * 4)

    flat_args = [x_p]
    for (w_p, b_p) in padded:
        flat_args += [w_p, b_p]

    if use_resident:
        in_specs = [pl.BlockSpec((TB, D_pad), lambda i: (i, 0))]
        for (w_p, _b_p) in padded:
            nf, d_in_p, d_out_p = w_p.shape
            in_specs += [
                pl.BlockSpec((nf, d_in_p, d_out_p), lambda i: (0, 0, 0),
                             pipeline_mode=pl.Buffered(1)),   # grid-invariant: 1 buffer
                pl.BlockSpec((nf, 1, d_out_p), lambda i: (0, 0, 0),
                             pipeline_mode=pl.Buffered(1)),
            ]
        grid_spec = pltpu.PrefetchScalarGridSpec(
            num_scalar_prefetch=0,
            grid=(n_btiles,),
            in_specs=in_specs,
            out_specs=pl.BlockSpec((TB, D_pad), lambda i: (i, 0)),
        )
        kernel = _make_resident_kernel(
            n_flow, n_layers, unroll_flows=(n_flow <= _UNROLL_FLOW_MAX))
        dim_sem = ("parallel",)
    else:
        in_specs = [pl.BlockSpec((TB, D_pad), lambda i, f: (i, 0))]
        for (w_p, _b_p) in padded:
            nf, d_in_p, d_out_p = w_p.shape
            in_specs += [
                pl.BlockSpec((1, d_in_p, d_out_p), lambda i, f: (f, 0, 0)),
                pl.BlockSpec((1, 1, d_out_p), lambda i, f: (f, 0, 0)),
            ]
        grid_spec = pltpu.PrefetchScalarGridSpec(
            num_scalar_prefetch=0,
            grid=(n_btiles, n_flow),
            in_specs=in_specs,
            out_specs=pl.BlockSpec((TB, D_pad), lambda i, f: (i, 0)),
            scratch_shapes=[pltpu.VMEM((TB, D_pad), jnp.float32)],
        )
        kernel = _make_streamed_kernel(n_layers)
        dim_sem = ("parallel", "arbitrary")

    out_p = pl.pallas_call(
        kernel,
        out_shape=jax.ShapeDtypeStruct((B_pad, D_pad), jnp.float32),
        grid_spec=grid_spec,
        compiler_params=pltpu.CompilerParams(
            dimension_semantics=dim_sem,
            vmem_limit_bytes=vmem_limit,
        ),
        cost_estimate=cost,
        input_output_aliases={0: 0},   # padded x buffer reused for the padded output
    )(*flat_args)

    return out_p[:B, :D]


def flownet_forward_ref(x, params, mirror_bf16=False):
    """Pure-JAX reference of FlowNet.forward.

    mirror_bf16=True reproduces the kernel's intentional bf16 matmul operands
    (fp32 accumulation); False is the full-fp32 module semantics.
    """
    n_flow = params[0][0].shape[0]
    n_layers = len(params)
    x = x.astype(jnp.float32)
    for f in range(n_flow):
        h = x
        for k in range(n_layers):
            w = params[k][0][f]
            b = params[k][1][f].astype(jnp.float32)
            if mirror_bf16:
                h = jnp.dot(h.astype(jnp.bfloat16), w.astype(jnp.bfloat16),
                            preferred_element_type=jnp.float32) + b
            else:
                h = h @ w.astype(jnp.float32) + b
            if k < n_layers - 1:
                h = jnp.maximum(h, 0.0)
        x = x + h
    return x


if __name__ == "__main__":
    # Small shapes consistent with the module: x is (batch, input_dim).
    B = 8
    input_dim = 16
    n_flow = 4
    l_hidden = (32,)  # one hidden layer, relu activation, linear output

    key = jax.random.PRNGKey(0)
    kx, kp = jax.random.split(key)
    x = jax.random.normal(kx, (B, input_dim), jnp.float32)
    params = init_flownet_params(kp, input_dim, n_flow, l_hidden)

    # Resident (weights-in-VMEM) path.
    out = jax.block_until_ready(flownet_forward(x, params))
    assert out.shape == (B, input_dim)

    ref_mirror = flownet_forward_ref(x, params, mirror_bf16=True)
    ref_fp32 = flownet_forward_ref(x, params, mirror_bf16=False)
    assert jnp.allclose(out, ref_mirror, atol=1e-2, rtol=1e-2), \
        "resident path mismatch vs bf16-mirrored reference"
    assert jnp.allclose(out, ref_fp32, atol=8e-2, rtol=8e-2), \
        "resident path mismatch vs fp32 reference"

    # Streamed (per-flow weight pipeline) fallback path, forced for coverage.
    out_s = jax.block_until_ready(flownet_forward(x, params, force_streamed=True))
    assert out_s.shape == (B, input_dim)
    assert jnp.allclose(out_s, ref_mirror, atol=1e-2, rtol=1e-2), \
        "streamed path mismatch vs bf16-mirrored reference"

    print("KERNEL_OK")
</pallas_src>

<mosaic_0001>
module attributes {stable_mosaic.version = 11 : i64} {
  func.func @kernel(%arg0: i32, %arg1: memref<8x128xf32, #tpu.memory_space<vmem>>, %arg2: memref<4x128x128xbf16, #tpu.memory_space<vmem>>, %arg3: memref<4x1x128xf32, #tpu.memory_space<vmem>>, %arg4: memref<4x128x128xbf16, #tpu.memory_space<vmem>>, %arg5: memref<4x1x128xf32, #tpu.memory_space<vmem>>, %arg6: memref<8x128xf32, #tpu.memory_space<vmem>>) attributes {dimension_semantics = [#tpu.dimension_semantics<parallel>], iteration_bounds = array<i64: 1>, scalar_prefetch = 0 : i64, scratch_operands = 0 : i64, tpu.core_type = #tpu.core_type<tc>, window_params = [{transform_indices = @transform_0, window_bounds = array<i64: 8, 128>}, {pipeline_mode = #tpu.pipeline_mode<synchronous>, transform_indices = @transform_1, window_bounds = array<i64: 4, 128, 128>}, {pipeline_mode = #tpu.pipeline_mode<synchronous>, transform_indices = @transform_2, window_bounds = array<i64: 4, 1, 128>}, {pipeline_mode = #tpu.pipeline_mode<synchronous>, transform_indices = @transform_3, window_bounds = array<i64: 4, 128, 128>}, {pipeline_mode = #tpu.pipeline_mode<synchronous>, transform_indices = @transform_4, window_bounds = array<i64: 4, 1, 128>}, {transform_indices = @transform_5, window_bounds = array<i64: 8, 128>}]} {
    %c0 = arith.constant 0 : index
    %c0_0 = arith.constant 0 : index
    %0 = vector.load %arg1[%c0, %c0_0] : memref<8x128xf32, #tpu.memory_space<vmem>>, vector<8x128xf32>
    %c0_1 = arith.constant 0 : index
    %c0_2 = arith.constant 0 : index
    %c0_3 = arith.constant 0 : index
    %1 = vector.load %arg2[%c0_1, %c0_2, %c0_3] : memref<4x128x128xbf16, #tpu.memory_space<vmem>>, vector<1x128x128xbf16>
    %2 = vector.shape_cast %1 : vector<1x128x128xbf16> to vector<128x128xbf16>
    %c0_4 = arith.constant 0 : index
    %c0_5 = arith.constant 0 : index
    %c0_6 = arith.constant 0 : index
    %3 = vector.load %arg3[%c0_4, %c0_5, %c0_6] : memref<4x1x128xf32, #tpu.memory_space<vmem>>, vector<1x1x128xf32>
    %4 = vector.shape_cast %3 : vector<1x1x128xf32> to vector<1x128xf32>
    %5 = arith.truncf %0 : vector<8x128xf32> to vector<8x128xbf16>
    %cst = arith.constant dense<0.000000e+00> : vector<8x128xf32>
    %6 = tpu.matmul %5, %2, %cst {dimension_numbers = #tpu.dot_dimension_numbers<[1], [0], [0], [1], [0, 0, 1, 1], [], []>} : vector<8x128xbf16>, vector<128x128xbf16>, vector<8x128xf32> -> vector<8x128xf32>
    %7 = vector.broadcast %4 : vector<1x128xf32> to vector<8x128xf32>
    %8 = arith.addf %6, %7 : vector<8x128xf32>
    %cst_7 = arith.constant 0.000000e+00 : f32
    %9 = vector.broadcast %cst_7 : f32 to vector<8x128xf32>
    %10 = arith.maximumf %8, %9 : vector<8x128xf32>
    %c0_8 = arith.constant 0 : index
    %c0_9 = arith.constant 0 : index
    %c0_10 = arith.constant 0 : index
    %11 = vector.load %arg4[%c0_8, %c0_9, %c0_10] : memref<4x128x128xbf16, #tpu.memory_space<vmem>>, vector<1x128x128xbf16>
    %12 = vector.shape_cast %11 : vector<1x128x128xbf16> to vector<128x128xbf16>
    %c0_11 = arith.constant 0 : index
    %c0_12 = arith.constant 0 : index
    %c0_13 = arith.constant 0 : index
    %13 = vector.load %arg5[%c0_11, %c0_12, %c0_13] : memref<4x1x128xf32, #tpu.memory_space<vmem>>, vector<1x1x128xf32>
    %14 = vector.shape_cast %13 : vector<1x1x128xf32> to vector<1x128xf32>
    %15 = arith.truncf %10 : vector<8x128xf32> to vector<8x128xbf16>
    %cst_14 = arith.constant dense<0.000000e+00> : vector<8x128xf32>
    %16 = tpu.matmul %15, %12, %cst_14 {dimension_numbers = #tpu.dot_dimension_numbers<[1], [0], [0], [1], [0, 0, 1, 1], [], []>} : vector<8x128xbf16>, vector<128x128xbf16>, vector<8x128xf32> -> vector<8x128xf32>
    %17 = vector.broadcast %14 : vector<1x128xf32> to vector<8x128xf32>
    %18 = arith.addf %16, %17 : vector<8x128xf32>
    %19 = arith.addf %0, %18 : vector<8x128xf32>
    %c1 = arith.constant 1 : index
    %c0_15 = arith.constant 0 : index
    %c0_16 = arith.constant 0 : index
    %20 = vector.load %arg2[%c1, %c0_15, %c0_16] : memref<4x128x128xbf16, #tpu.memory_space<vmem>>, vector<1x128x128xbf16>
    %21 = vector.shape_cast %20 : vector<1x128x128xbf16> to vector<128x128xbf16>
    %c1_17 = arith.constant 1 : index
    %c0_18 = arith.constant 0 : index
    %c0_19 = arith.constant 0 : index
    %22 = vector.load %arg3[%c1_17, %c0_18, %c0_19] : memref<4x1x128xf32, #tpu.memory_space<vmem>>, vector<1x1x128xf32>
    %23 = vector.shape_cast %22 : vector<1x1x128xf32> to vector<1x128xf32>
    %24 = arith.truncf %19 : vector<8x128xf32> to vector<8x128xbf16>
    %cst_20 = arith.constant dense<0.000000e+00> : vector<8x128xf32>
    %25 = tpu.matmul %24, %21, %cst_20 {dimension_numbers = #tpu.dot_dimension_numbers<[1], [0], [0], [1], [0, 0, 1, 1], [], []>} : vector<8x128xbf16>, vector<128x128xbf16>, vector<8x128xf32> -> vector<8x128xf32>
    %26 = vector.broadcast %23 : vector<1x128xf32> to vector<8x128xf32>
    %27 = arith.addf %25, %26 : vector<8x128xf32>
    %cst_21 = arith.constant 0.000000e+00 : f32
    %28 = vector.broadcast %cst_21 : f32 to vector<8x128xf32>
    %29 = arith.maximumf %27, %28 : vector<8x128xf32>
    %c1_22 = arith.constant 1 : index
    %c0_23 = arith.constant 0 : index
    %c0_24 = arith.constant 0 : index
    %30 = vector.load %arg4[%c1_22, %c0_23, %c0_24] : memref<4x128x128xbf16, #tpu.memory_space<vmem>>, vector<1x128x128xbf16>
    %31 = vector.shape_cast %30 : vector<1x128x128xbf16> to vector<128x128xbf16>
    %c1_25 = arith.constant 1 : index
    %c0_26 = arith.constant 0 : index
    %c0_27 = arith.constant 0 : index
    %32 = vector.load %arg5[%c1_25, %c0_26, %c0_27] : memref<4x1x128xf32, #tpu.memory_space<vmem>>, vector<1x1x128xf32>
    %33 = vector.shape_cast %32 : vector<1x1x128xf32> to vector<1x128xf32>
    %34 = arith.truncf %29 : vector<8x128xf32> to vector<8x128xbf16>
    %cst_28 = arith.constant dense<0.000000e+00> : vector<8x128xf32>
    %35 = tpu.matmul %34, %31, %cst_28 {dimension_numbers = #tpu.dot_dimension_numbers<[1], [0], [0], [1], [0, 0, 1, 1], [], []>} : vector<8x128xbf16>, vector<128x128xbf16>, vector<8x128xf32> -> vector<8x128xf32>
    %36 = vector.broadcast %33 : vector<1x128xf32> to vector<8x128xf32>
    %37 = arith.addf %35, %36 : vector<8x128xf32>
    %38 = arith.addf %19, %37 : vector<8x128xf32>
    %c2 = arith.constant 2 : index
    %c0_29 = arith.constant 0 : index
    %c0_30 = arith.constant 0 : index
    %39 = vector.load %arg2[%c2, %c0_29, %c0_30] : memref<4x128x128xbf16, #tpu.memory_space<vmem>>, vector<1x128x128xbf16>
    %40 = vector.shape_cast %39 : vector<1x128x128xbf16> to vector<128x128xbf16>
    %c2_31 = arith.constant 2 : index
    %c0_32 = arith.constant 0 : index
    %c0_33 = arith.constant 0 : index
    %41 = vector.load %arg3[%c2_31, %c0_32, %c0_33] : memref<4x1x128xf32, #tpu.memory_space<vmem>>, vector<1x1x128xf32>
    %42 = vector.shape_cast %41 : vector<1x1x128xf32> to vector<1x128xf32>
    %43 = arith.truncf %38 : vector<8x128xf32> to vector<8x128xbf16>
    %cst_34 = arith.constant dense<0.000000e+00> : vector<8x128xf32>
    %44 = tpu.matmul %43, %40, %cst_34 {dimension_numbers = #tpu.dot_dimension_numbers<[1], [0], [0], [1], [0, 0, 1, 1], [], []>} : vector<8x128xbf16>, vector<128x128xbf16>, vector<8x128xf32> -> vector<8x128xf32>
    %45 = vector.broadcast %42 : vector<1x128xf32> to vector<8x128xf32>
    %46 = arith.addf %44, %45 : vector<8x128xf32>
    %cst_35 = arith.constant 0.000000e+00 : f32
    %47 = vector.broadcast %cst_35 : f32 to vector<8x128xf32>
    %48 = arith.maximumf %46, %47 : vector<8x128xf32>
    %c2_36 = arith.constant 2 : index
    %c0_37 = arith.constant 0 : index
    %c0_38 = arith.constant 0 : index
    %49 = vector.load %arg4[%c2_36, %c0_37, %c0_38] : memref<4x128x128xbf16, #tpu.memory_space<vmem>>, vector<1x128x128xbf16>
    %50 = vector.shape_cast %49 : vector<1x128x128xbf16> to vector<128x128xbf16>
    %c2_39 = arith.constant 2 : index
    %c0_40 = arith.constant 0 : index
    %c0_41 = arith.constant 0 : index
    %51 = vector.load %arg5[%c2_39, %c0_40, %c0_41] : memref<4x1x128xf32, #tpu.memory_space<vmem>>, vector<1x1x128xf32>
    %52 = vector.shape_cast %51 : vector<1x1x128xf32> to vector<1x128xf32>
    %53 = arith.truncf %48 : vector<8x128xf32> to vector<8x128xbf16>
    %cst_42 = arith.constant dense<0.000000e+00> : vector<8x128xf32>
    %54 = tpu.matmul %53, %50, %cst_42 {dimension_numbers = #tpu.dot_dimension_numbers<[1], [0], [0], [1], [0, 0, 1, 1], [], []>} : vector<8x128xbf16>, vector<128x128xbf16>, vector<8x128xf32> -> vector<8x128xf32>
    %55 = vector.broadcast %52 : vector<1x128xf32> to vector<8x128xf32>
    %56 = arith.addf %54, %55 : vector<8x128xf32>
    %57 = arith.addf %38, %56 : vector<8x128xf32>
    %c3 = arith.constant 3 : index
    %c0_43 = arith.constant 0 : index
    %c0_44 = arith.constant 0 : index
    %58 = vector.load %arg2[%c3, %c0_43, %c0_44] : memref<4x128x128xbf16, #tpu.memory_space<vmem>>, vector<1x128x128xbf16>
    %59 = vector.shape_cast %58 : vector<1x128x128xbf16> to vector<128x128xbf16>
    %c3_45 = arith.constant 3 : index
    %c0_46 = arith.constant 0 : index
    %c0_47 = arith.constant 0 : index
    %60 = vector.load %arg3[%c3_45, %c0_46, %c0_47] : memref<4x1x128xf32, #tpu.memory_space<vmem>>, vector<1x1x128xf32>
    %61 = vector.shape_cast %60 : vector<1x1x128xf32> to vector<1x128xf32>
    %62 = arith.truncf %57 : vector<8x128xf32> to vector<8x128xbf16>
    %cst_48 = arith.constant dense<0.000000e+00> : vector<8x128xf32>
    %63 = tpu.matmul %62, %59, %cst_48 {dimension_numbers = #tpu.dot_dimension_numbers<[1], [0], [0], [1], [0, 0, 1, 1], [], []>} : vector<8x128xbf16>, vector<128x128xbf16>, vector<8x128xf32> -> vector<8x128xf32>
    %64 = vector.broadcast %61 : vector<1x128xf32> to vector<8x128xf32>
    %65 = arith.addf %63, %64 : vector<8x128xf32>
    %cst_49 = arith.constant 0.000000e+00 : f32
    %66 = vector.broadcast %cst_49 : f32 to vector<8x128xf32>
    %67 = arith.maximumf %65, %66 : vector<8x128xf32>
    %c3_50 = arith.constant 3 : index
    %c0_51 = arith.constant 0 : index
    %c0_52 = arith.constant 0 : index
    %68 = vector.load %arg4[%c3_50, %c0_51, %c0_52] : memref<4x128x128xbf16, #tpu.memory_space<vmem>>, vector<1x128x128xbf16>
    %69 = vector.shape_cast %68 : vector<1x128x128xbf16> to vector<128x128xbf16>
    %c3_53 = arith.constant 3 : index
    %c0_54 = arith.constant 0 : index
    %c0_55 = arith.constant 0 : index
    %70 = vector.load %arg5[%c3_53, %c0_54, %c0_55] : memref<4x1x128xf32, #tpu.memory_space<vmem>>, vector<1x1x128xf32>
    %71 = vector.shape_cast %70 : vector<1x1x128xf32> to vector<1x128xf32>
    %72 = arith.truncf %67 : vector<8x128xf32> to vector<8x128xbf16>
    %cst_56 = arith.constant dense<0.000000e+00> : vector<8x128xf32>
    %73 = tpu.matmul %72, %69, %cst_56 {dimension_numbers = #tpu.dot_dimension_numbers<[1], [0], [0], [1], [0, 0, 1, 1], [], []>} : vector<8x128xbf16>, vector<128x128xbf16>, vector<8x128xf32> -> vector<8x128xf32>
    %74 = vector.broadcast %71 : vector<1x128xf32> to vector<8x128xf32>
    %75 = arith.addf %73, %74 : vector<8x128xf32>
    %76 = arith.addf %57, %75 : vector<8x128xf32>
    %c0_57 = arith.constant 0 : index
    %c0_58 = arith.constant 0 : index
    %77 = vector.load %arg6[%c0_57, %c0_58] : memref<8x128xf32, #tpu.memory_space<vmem>>, vector<8x128xf32>
    tpu.vector_store %arg6[%c0_57, %c0_58], %76 {strides = array<i32>} : memref<8x128xf32, #tpu.memory_space<vmem>>, vector<8x128xf32>,
    return
  }
  func.func @transform_0(%arg0: i32) -> (i32, i32) {
    %c0_i32 = arith.constant 0 : i32
    %c0_i32_0 = arith.constant 0 : i32
    return %arg0, %c0_i32 : i32, i32
  }
  func.func @transform_1(%arg0: i32) -> (i32, i32, i32) {
    %c0_i32 = arith.constant 0 : i32
    %c0_i32_0 = arith.constant 0 : i32
    %c0_i32_1 = arith.constant 0 : i32
    %c0_i32_2 = arith.constant 0 : i32
    return %c0_i32, %c0_i32_0, %c0_i32_1 : i32, i32, i32
  }
  func.func @transform_2(%arg0: i32) -> (i32, i32, i32) {
    %c0_i32 = arith.constant 0 : i32
    %c0_i32_0 = arith.constant 0 : i32
    %c0_i32_1 = arith.constant 0 : i32
    %c0_i32_2 = arith.constant 0 : i32
    return %c0_i32, %c0_i32_0, %c0_i32_1 : i32, i32, i32
  }
  func.func @transform_3(%arg0: i32) -> (i32, i32, i32) {
    %c0_i32 = arith.constant 0 : i32
    %c0_i32_0 = arith.constant 0 : i32
    %c0_i32_1 = arith.constant 0 : i32
    %c0_i32_2 = arith.constant 0 : i32
    return %c0_i32, %c0_i32_0, %c0_i32_1 : i32, i32, i32
  }
  func.func @transform_4(%arg0: i32) -> (i32, i32, i32) {
    %c0_i32 = arith.constant 0 : i32
    %c0_i32_0 = arith.constant 0 : i32
    %c0_i32_1 = arith.constant 0 : i32
    %c0_i32_2 = arith.constant 0 : i32
    return %c0_i32, %c0_i32_0, %c0_i32_1 : i32, i32, i32
  }
  func.func @transform_5(%arg0: i32) -> (i32, i32) {
    %c0_i32 = arith.constant 0 : i32
    %c0_i32_0 = arith.constant 0 : i32
    return %arg0, %c0_i32 : i32, i32
  }
}

</mosaic_0001>

<llo_original>
// kernel: flownet_forward.1
$region0: #{flownet_forward.1}
  #allocation0 [shape = 'u32[]', space=smem, size = 0x4, offset = 0x4, fixed_abs, tag = 'smem constant byte address 0x4 - core index']
  #allocation1 [shape = 'u32[144,128]{1,0:T(1,128)}', space=vmem, size = 0x12000, scoped, tag = 'internal scratch']
  %s0 = inlined_call_operand.vmem [shape: f32[8,128], index: 0, kind: input, shape index: {}, may-alias: {0,5}]
  %s1 = inlined_call_operand.vmem [shape: bf16[4,128,128], index: 1, kind: input, shape index: {}]
  %s2 = inlined_call_operand.vmem [shape: f32[4,1,128], index: 2, kind: input, shape index: {}]
  %s3 = inlined_call_operand.vmem [shape: bf16[4,128,128], index: 3, kind: input, shape index: {}]
  %s4 = inlined_call_operand.vmem [shape: f32[4,1,128], index: 4, kind: input, shape index: {}]
  %s5 = inlined_call_operand.vmem [shape: f32[8,128], index: 5, kind: output, shape index: {}, may-alias: {0,5}]
  %s6 = sld [smem:[#allocation0]]
  $region30: #{flownet_forward.1} parent=0
    _
  %s8 = ssub.s32 1, %s6
  %s9 = scalar_select 0, %s8, %s6
  // Predicated region
  $region2: #{flownet_forward.1} parent=0 // pred_check
    _
  $region3: #{flownet_forward.1} parent=0 // pred_check_branch
    %11 = sbr.rel (0) target = $region5
  $region4: #{flownet_forward.1} parent=0 // pred_region
    _
  $region5: #{flownet_forward.1} parent=0 // pred_fallthru
    _
  // Predicated region
  $region6: #{flownet_forward.1} parent=0 // pred_check
    _
  $region7: #{flownet_forward.1} parent=0 // pred_check_branch
    %13 = sbr.rel (0) target = $region9
  $region8: #{flownet_forward.1} parent=0 // pred_region
    _
  $region9: #{flownet_forward.1} parent=0 // pred_fallthru
    _
  // Predicated region
  $region10: #{flownet_forward.1} parent=0 // pred_check
    _
  $region11: #{flownet_forward.1} parent=0 // pred_check_branch
    %15 = sbr.rel (0) target = $region13
  $region12: #{flownet_forward.1} parent=0 // pred_region
    _
  $region13: #{flownet_forward.1} parent=0 // pred_fallthru
    _
  // Predicated region
  $region14: #{flownet_forward.1} parent=0 // pred_check
    _
  $region15: #{flownet_forward.1} parent=0 // pred_check_branch
    %17 = sbr.rel (0) target = $region17
  $region16: #{flownet_forward.1} parent=0 // pred_region
    _
  $region17: #{flownet_forward.1} parent=0 // pred_fallthru
    _
  // Predicated region
  $region18: #{flownet_forward.1} parent=0 // pred_check
    _
  $region19: #{flownet_forward.1} parent=0 // pred_check_branch
    %19 = sbr.rel (0) target = $region21
  $region20: #{flownet_forward.1} parent=0 // pred_region
    _
  $region21: #{flownet_forward.1} parent=0 // pred_fallthru
    _
  %v21 = vld [vmem:[%s0] sm:$0xff]
  %v22 = vld [vmem:[%s1] sm:$0xf]
  %v23 = vld [vmem:[%s1 + $0x4] sm:$0xf]
  %v24 = vld [vmem:[%s1 + $0x8] sm:$0xf]
  %v25 = vld [vmem:[%s1 + $0xc] sm:$0xf]
  %v26 = vld [vmem:[%s1 + $0x10] sm:$0xf]
  %v27 = vld [vmem:[%s1 + $0x14] sm:$0xf]
  %v28 = vld [vmem:[%s1 + $0x18] sm:$0xf]
  %v29 = vld [vmem:[%s1 + $0x1c] sm:$0xf]
  %v30 = vld [vmem:[%s1 + $0x20] sm:$0xf]
  %v31 = vld [vmem:[%s1 + $0x24] sm:$0xf]
  %v32 = vld [vmem:[%s1 + $0x28] sm:$0xf]
  %v33 = vld [vmem:[%s1 + $0x2c] sm:$0xf]
  %v34 = vld [vmem:[%s1 + $0x30] sm:$0xf]
  %v35 = vld [vmem:[%s1 + $0x34] sm:$0xf]
  %v36 = vld [vmem:[%s1 + $0x38] sm:$0xf]
  %v37 = vld [vmem:[%s1 + $0x3c] sm:$0xf]
  %v38 = vld [vmem:[%s2] sm:$0x1]
  %v39 = vpack.c.bf16 %v21, %v21
  %v41 = vlaneseq
  %v42 = vshrl.u32 %v41, 7
  %v43 = vsub.s32 0, %v42
  %v44 = vrot.slane %v38, %v43
  %v62 = vunpack.c.l.b16 %v22
  %v63 = vunpack.c.l.b16 %v23
  %v64 = vunpack.c.l.b16 %v24
  %v65 = vunpack.c.l.b16 %v25
  %v66 = vunpack.c.l.b16 %v26
  %v67 = vunpack.c.l.b16 %v27
  %v68 = vunpack.c.l.b16 %v28
  %v69 = vunpack.c.l.b16 %v29
  %v70 = vunpack.c.l.b16 %v30
  %v71 = vunpack.c.l.b16 %v31
  %v72 = vunpack.c.l.b16 %v32
  %v73 = vunpack.c.l.b16 %v33
  %v74 = vunpack.c.l.b16 %v34
  %v75 = vunpack.c.l.b16 %v35
  %v76 = vunpack.c.l.b16 %v36
  %v77 = vunpack.c.l.b16 %v37
  %v78 = vpack.c.b16 %v63, %v62
  %v79 = vpack.c.b16 %v65, %v64
  %v80 = vpack.c.b16 %v67, %v66
  %v81 = vpack.c.b16 %v69, %v68
  %v82 = vpack.c.b16 %v71, %v70
  %v83 = vpack.c.b16 %v73, %v72
  %v84 = vpack.c.b16 %v75, %v74
  %v85 = vpack.c.b16 %v77, %v76
  %94 = vmatprep.subr.bf16.mxu0 0
  %95 = vmatpush1.bf16.msra.mxu0 %v78
  %96 = vmatprep.subr.bf16.mxu0 0
  %97 = vmatpush1.bf16.msra.mxu0 %v79
  %98 = vmatprep.subr.bf16.mxu0 0
  %99 = vmatpush1.bf16.msra.mxu0 %v80
  %100 = vmatprep.subr.bf16.mxu0 0
  %101 = vmatpush1.bf16.msra.mxu0 %v81
  %102 = vmatprep.subr.bf16.mxu0 0
  %103 = vmatpush1.bf16.msra.mxu0 %v82
  %104 = vmatprep.subr.bf16.mxu0 0
  %105 = vmatpush1.bf16.msra.mxu0 %v83
  %106 = vmatprep.subr.bf16.mxu0 0
  %107 = vmatpush1.bf16.msra.mxu0 %v84
  %108 = vmatprep.subr.bf16.mxu0 0
  %109 = vmatpush1.bf16.msra.mxu0 %v85
  %110 = vmatprep.subr.bf16.mxu0 0
  %111 = vmatpush1.bf16.msra.mxu0 0
  %112 = vmatprep.subr.bf16.mxu0 0
  %113 = vmatpush1.bf16.msra.mxu0 0
  %114 = vmatprep.subr.bf16.mxu0 0
  %115 = vmatpush1.bf16.msra.mxu0 0
  %116 = vmatprep.subr.bf16.mxu0 0
  %117 = vmatpush1.bf16.msra.mxu0 0
  %118 = vmatprep.subr.bf16.mxu0 0
  %119 = vmatpush1.bf16.msra.mxu0 0
  %120 = vmatprep.subr.bf16.mxu0 0
  %121 = vmatpush1.bf16.msra.mxu0 0
  %122 = vmatprep.subr.bf16.mxu0 0
  %123 = vmatpush1.bf16.msra.mxu0 0
  %124 = vmatprep.subr.bf16.mxu0 0
  %125 = vmatpush1.bf16.msra.mxu0 0
  %126 = vmatprep.mubr.bf16.mxu0 0
  %127 = vmatmul.mubr.bf16.gmra.mrb[0].mxu0 %v39
  %v128 = vpop.f32.mrb[0].mxu0
  %v129 = vadd.f32 %v44, %v128
  %v130 = vpop.f32.mrb[0].mxu0
  %v131 = vpop.f32.mrb[0].mxu0
  %v132 = vpop.f32.mrb[0].mxu0
  %133 = vdwg.mxu0
  %v134 = vmax.f32 %v129, 0.0
  %v135 = vld [vmem:[%s3] sm:$0xf]
  %v136 = vld [vmem:[%s3 + $0x4] sm:$0xf]
  %v137 = vld [vmem:[%s3 + $0x8] sm:$0xf]
  %v138 = vld [vmem:[%s3 + $0xc] sm:$0xf]
  %v139 = vld [vmem:[%s3 + $0x10] sm:$0xf]
  %v140 = vld [vmem:[%s3 + $0x14] sm:$0xf]
  %v141 = vld [vmem:[%s3 + $0x18] sm:$0xf]
  %v142 = vld [vmem:[%s3 + $0x1c] sm:$0xf]
  %v143 = vld [vmem:[%s3 + $0x20] sm:$0xf]
  %v144 = vld [vmem:[%s3 + $0x24] sm:$0xf]
  %v145 = vld [vmem:[%s3 + $0x28] sm:$0xf]
  %v146 = vld [vmem:[%s3 + $0x2c] sm:$0xf]
  %v147 = vld [vmem:[%s3 + $0x30] sm:$0xf]
  %v148 = vld [vmem:[%s3 + $0x34] sm:$0xf]
  %v149 = vld [vmem:[%s3 + $0x38] sm:$0xf]
  %v150 = vld [vmem:[%s3 + $0x3c] sm:$0xf]
  %v151 = vld [vmem:[%s4] sm:$0x1]
  %v152 = vpack.c.bf16 %v134, %v134
  %v154 = vlaneseq
  %v155 = vshrl.u32 %v154, 7
  %v156 = vsub.s32 0, %v155
  %v157 = vrot.slane %v151, %v156
  %v175 = vunpack.c.l.b16 %v135
  %v176 = vunpack.c.l.b16 %v136
  %v177 = vunpack.c.l.b16 %v137
  %v178 = vunpack.c.l.b16 %v138
  %v179 = vunpack.c.l.b16 %v139
  %v180 = vunpack.c.l.b16 %v140
  %v181 = vunpack.c.l.b16 %v141
  %v182 = vunpack.c.l.b16 %v142
  %v183 = vunpack.c.l.b16 %v143
  %v184 = vunpack.c.l.b16 %v144
  %v185 = vunpack.c.l.b16 %v145
  %v186 = vunpack.c.l.b16 %v146
  %v187 = vunpack.c.l.b16 %v147
  %v188 = vunpack.c.l.b16 %v148
  %v189 = vunpack.c.l.b16 %v149
  %v190 = vunpack.c.l.b16 %v150
  %v191 = vpack.c.b16 %v176, %v175
  %v192 = vpack.c.b16 %v178, %v177
  %v193 = vpack.c.b16 %v180, %v179
  %v194 = vpack.c.b16 %v182, %v181
  %v195 = vpack.c.b16 %v184, %v183
  %v196 = vpack.c.b16 %v186, %v185
  %v197 = vpack.c.b16 %v188, %v187
  %v198 = vpack.c.b16 %v190, %v189
  %207 = vmatprep.subr.bf16.mxu0 0
  %208 = vmatpush1.bf16.msra.mxu0 %v191
  %209 = vmatprep.subr.bf16.mxu0 0
  %210 = vmatpush1.bf16.msra.mxu0 %v192
  %211 = vmatprep.subr.bf16.mxu0 0
  %212 = vmatpush1.bf16.msra.mxu0 %v193
  %213 = vmatprep.subr.bf16.mxu0 0
  %214 = vmatpush1.bf16.msra.mxu0 %v194
  %215 = vmatprep.subr.bf16.mxu0 0
  %216 = vmatpush1.bf16.msra.mxu0 %v195
  %217 = vmatprep.subr.bf16.mxu0 0
  %218 = vmatpush1.bf16.msra.mxu0 %v196
  %219 = vmatprep.subr.bf16.mxu0 0
  %220 = vmatpush1.bf16.msra.mxu0 %v197
  %221 = vmatprep.subr.bf16.mxu0 0
  %222 = vmatpush1.bf16.msra.mxu0 %v198
  %223 = vmatprep.subr.bf16.mxu0 0
  %224 = vmatpush1.bf16.msra.mxu0 0
  %225 = vmatprep.subr.bf16.mxu0 0
  %226 = vmatpush1.bf16.msra.mxu0 0
  %227 = vmatprep.subr.bf16.mxu0 0
  %228 = vmatpush1.bf16.msra.mxu0 0
  %229 = vmatprep.subr.bf16.mxu0 0
  %230 = vmatpush1.bf16.msra.mxu0 0
  %231 = vmatprep.subr.bf16.mxu0 0
  %232 = vmatpush1.bf16.msra.mxu0 0
  %233 = vmatprep.subr.bf16.mxu0 0
  %234 = vmatpush1.bf16.msra.mxu0 0
  %235 = vmatprep.subr.bf16.mxu0 0
  %236 = vmatpush1.bf16.msra.mxu0 0
  %237 = vmatprep.subr.bf16.mxu0 0
  %238 = vmatpush1.bf16.msra.mxu0 0
  %239 = vmatprep.mubr.bf16.mxu0 0
  %240 = vmatmul.mubr.bf16.gmra.mrb[0].mxu0 %v152
  %v241 = vpop.f32.mrb[0].mxu0
  %v242 = vadd.f32 %v157, %v241
  %v243 = vpop.f32.mrb[0].mxu0
  %v244 = vpop.f32.mrb[0].mxu0
  %v245 = vpop.f32.mrb[0].mxu0
  %246 = vdwg.mxu0
  %v247 = vadd.f32 %v21, %v242
  %s248 = scalar_lea.vmem %s1, 64
  %v249 = vld [vmem:[%s248] sm:$0xf]
  %v250 = vld [vmem:[%s248 + $0x4] sm:$0xf]
  %v251 = vld [vmem:[%s248 + $0x8] sm:$0xf]
  %v252 = vld [vmem:[%s248 + $0xc] sm:$0xf]
  %v253 = vld [vmem:[%s248 + $0x10] sm:$0xf]
  %v254 = vld [vmem:[%s248 + $0x14] sm:$0xf]
  %v255 = vld [vmem:[%s248 + $0x18] sm:$0xf]
  %v256 = vld [vmem:[%s248 + $0x1c] sm:$0xf]
  %v257 = vld [vmem:[%s248 + $0x20] sm:$0xf]
  %v258 = vld [vmem:[%s248 + $0x24] sm:$0xf]
  %v259 = vld [vmem:[%s248 + $0x28] sm:$0xf]
  %v260 = vld [vmem:[%s248 + $0x2c] sm:$0xf]
  %v261 = vld [vmem:[%s248 + $0x30] sm:$0xf]
  %v262 = vld [vmem:[%s248 + $0x34] sm:$0xf]
  %v263 = vld [vmem:[%s248 + $0x38] sm:$0xf]
  %v264 = vld [vmem:[%s248 + $0x3c] sm:$0xf]
  %s265 = scalar_lea.vmem %s2, 1
  %v266 = vld [vmem:[%s265] sm:$0x1]
  %v267 = vpack.c.bf16 %v247, %v247
  %v269 = vlaneseq
  %v270 = vshrl.u32 %v269, 7
  %v271 = vsub.s32 0, %v270
  %v272 = vrot.slane %v266, %v271
  %v290 = vunpack.c.l.b16 %v249
  %v291 = vunpack.c.l.b16 %v250
  %v292 = vunpack.c.l.b16 %v251
  %v293 = vunpack.c.l.b16 %v252
  %v294 = vunpack.c.l.b16 %v253
  %v295 = vunpack.c.l.b16 %v254
  %v296 = vunpack.c.l.b16 %v255
  %v297 = vunpack.c.l.b16 %v256
  %v298 = vunpack.c.l.b16 %v257
  %v299 = vunpack.c.l.b16 %v258
  %v300 = vunpack.c.l.b16 %v259
  %v301 = vunpack.c.l.b16 %v260
  %v302 = vunpack.c.l.b16 %v261
  %v303 = vunpack.c.l.b16 %v262
  %v304 = vunpack.c.l.b16 %v263
  %v305 = vunpack.c.l.b16 %v264
  %v306 = vpack.c.b16 %v291, %v290
  %v307 = vpack.c.b16 %v293, %v292
  %v308 = vpack.c.b16 %v295, %v294
  %v309 = vpack.c.b16 %v297, %v296
  %v310 = vpack.c.b16 %v299, %v298
  %v311 = vpack.c.b16 %v301, %v300
  %v312 = vpack.c.b16 %v303, %v302
  %v313 = vpack.c.b16 %v305, %v304
  %322 = vmatprep.subr.bf16.mxu0 0
  %323 = vmatpush1.bf16.msra.mxu0 %v306
  %324 = vmatprep.subr.bf16.mxu0 0
  %325 = vmatpush1.bf16.msra.mxu0 %v307
  %326 = vmatprep.subr.bf16.mxu0 0
  %327 = vmatpush1.bf16.msra.mxu0 %v308
  %328 = vmatprep.subr.bf16.mxu0 0
  %329 = vmatpush1.bf16.msra.mxu0 %v309
  %330 = vmatprep.subr.bf16.mxu0 0
  %331 = vmatpush1.bf16.msra.mxu0 %v310
  %332 = vmatprep.subr.bf16.mxu0 0
  %333 = vmatpush1.bf16.msra.mxu0 %v311
  %334 = vmatprep.subr.bf16.mxu0 0
  %335 = vmatpush1.bf16.msra.mxu0 %v312
  %336 = vmatprep.subr.bf16.mxu0 0
  %337 = vmatpush1.bf16.msra.mxu0 %v313
  %338 = vmatprep.subr.bf16.mxu0 0
  %339 = vmatpush1.bf16.msra.mxu0 0
  %340 = vmatprep.subr.bf16.mxu0 0
  %341 = vmatpush1.bf16.msra.mxu0 0
  %342 = vmatprep.subr.bf16.mxu0 0
  %343 = vmatpush1.bf16.msra.mxu0 0
  %344 = vmatprep.subr.bf16.mxu0 0
  %345 = vmatpush1.bf16.msra.mxu0 0
  %346 = vmatprep.subr.bf16.mxu0 0
  %347 = vmatpush1.bf16.msra.mxu0 0
  %348 = vmatprep.subr.bf16.mxu0 0
  %349 = vmatpush1.bf16.msra.mxu0 0
  %350 = vmatprep.subr.bf16.mxu0 0
  %351 = vmatpush1.bf16.msra.mxu0 0
  %352 = vmatprep.subr.bf16.mxu0 0
  %353 = vmatpush1.bf16.msra.mxu0 0
  %354 = vmatprep.mubr.bf16.mxu0 0
  %355 = vmatmul.mubr.bf16.gmra.mrb[0].mxu0 %v267
  %v356 = vpop.f32.mrb[0].mxu0
  %v357 = vadd.f32 %v272, %v356
  %v358 = vpop.f32.mrb[0].mxu0
  %v359 = vpop.f32.mrb[0].mxu0
  %v360 = vpop.f32.mrb[0].mxu0
  %361 = vdwg.mxu0
  %v362 = vmax.f32 %v357, 0.0
  %s363 = scalar_lea.vmem %s3, 64
  %v364 = vld [vmem:[%s363] sm:$0xf]
  %v365 = vld [vmem:[%s363 + $0x4] sm:$0xf]
  %v366 = vld [vmem:[%s363 + $0x8] sm:$0xf]
  %v367 = vld [vmem:[%s363 + $0xc] sm:$0xf]
  %v368 = vld [vmem:[%s363 + $0x10] sm:$0xf]
  %v369 = vld [vmem:[%s363 + $0x14] sm:$0xf]
  %v370 = vld [vmem:[%s363 + $0x18] sm:$0xf]
  %v371 = vld [vmem:[%s363 + $0x1c] sm:$0xf]
  %v372 = vld [vmem:[%s363 + $0x20] sm:$0xf]
  %v373 = vld [vmem:[%s363 + $0x24] sm:$0xf]
  %v374 = vld [vmem:[%s363 + $0x28] sm:$0xf]
  %v375 = vld [vmem:[%s363 + $0x2c] sm:$0xf]
  %v376 = vld [vmem:[%s363 + $0x30] sm:$0xf]
  %v377 = vld [vmem:[%s363 + $0x34] sm:$0xf]
  %v378 = vld [vmem:[%s363 + $0x38] sm:$0xf]
  %v379 = vld [vmem:[%s363 + $0x3c] sm:$0xf]
  %s380 = scalar_lea.vmem %s4, 1
  %v381 = vld [vmem:[%s380] sm:$0x1]
  %v382 = vpack.c.bf16 %v362, %v362
  %v384 = vlaneseq
  %v385 = vshrl.u32 %v384, 7
  %v386 = vsub.s32 0, %v385
  %v387 = vrot.slane %v381, %v386
  %v405 = vunpack.c.l.b16 %v364
  %v406 = vunpack.c.l.b16 %v365
  %v407 = vunpack.c.l.b16 %v366
  %v408 = vunpack.c.l.b16 %v367
  %v409 = vunpack.c.l.b16 %v368
  %v410 = vunpack.c.l.b16 %v369
  %v411 = vunpack.c.l.b16 %v370
  %v412 = vunpack.c.l.b16 %v371
  %v413 = vunpack.c.l.b16 %v372
  %v414 = vunpack.c.l.b16 %v373
  %v415 = vunpack.c.l.b16 %v374
  %v416 = vunpack.c.l.b16 %v375
  %v417 = vunpack.c.l.b16 %v376
  %v418 = vunpack.c.l.b16 %v377
  %v419 = vunpack.c.l.b16 %v378
  %v420 = vunpack.c.l.b16 %v379
  %v421 = vpack.c.b16 %v406, %v405
  %v422 = vpack.c.b16 %v408, %v407
  %v423 = vpack.c.b16 %v410, %v409
  %v424 = vpack.c.b16 %v412, %v411
  %v425 = vpack.c.b16 %v414, %v413
  %v426 = vpack.c.b16 %v416, %v415
  %v427 = vpack.c.b16 %v418, %v417
  %v428 = vpack.c.b16 %v420, %v419
  %437 = vmatprep.subr.bf16.mxu0 0
  %438 = vmatpush1.bf16.msra.mxu0 %v421
  %439 = vmatprep.subr.bf16.mxu0 0
  %440 = vmatpush1.bf16.msra.mxu0 %v422
  %441 = vmatprep.subr.bf16.mxu0 0
  %442 = vmatpush1.bf16.msra.mxu0 %v423
  %443 = vmatprep.subr.bf16.mxu0 0
  %444 = vmatpush1.bf16.msra.mxu0 %v424
  %445 = vmatprep.subr.bf16.mxu0 0
  %446 = vmatpush1.bf16.msra.mxu0 %v425
  %447 = vmatprep.subr.bf16.mxu0 0
  %448 = vmatpush1.bf16.msra.mxu0 %v426
  %449 = vmatprep.subr.bf16.mxu0 0
  %450 = vmatpush1.bf16.msra.mxu0 %v427
  %451 = vmatprep.subr.bf16.mxu0 0
  %452 = vmatpush1.bf16.msra.mxu0 %v428
  %453 = vmatprep.subr.bf16.mxu0 0
  %454 = vmatpush1.bf16.msra.mxu0 0
  %455 = vmatprep.subr.bf16.mxu0 0
  %456 = vmatpush1.bf16.msra.mxu0 0
  %457 = vmatprep.subr.bf16.mxu0 0
  %458 = vmatpush1.bf16.msra.mxu0 0
  %459 = vmatprep.subr.bf16.mxu0 0
  %460 = vmatpush1.bf16.msra.mxu0 0
  %461 = vmatprep.subr.bf16.mxu0 0
  %462 = vmatpush1.bf16.msra.mxu0 0
  %463 = vmatprep.subr.bf16.mxu0 0
  %464 = vmatpush1.bf16.msra.mxu0 0
  %465 = vmatprep.subr.bf16.mxu0 0
  %466 = vmatpush1.bf16.msra.mxu0 0
  %467 = vmatprep.subr.bf16.mxu0 0
  %468 = vmatpush1.bf16.msra.mxu0 0
  %469 = vmatprep.mubr.bf16.mxu0 0
  %470 = vmatmul.mubr.bf16.gmra.mrb[0].mxu0 %v382
  %v471 = vpop.f32.mrb[0].mxu0
  %v472 = vadd.f32 %v387, %v471
  %v473 = vpop.f32.mrb[0].mxu0
  %v474 = vpop.f32.mrb[0].mxu0
  %v475 = vpop.f32.mrb[0].mxu0
  %476 = vdwg.mxu0
  %v477 = vadd.f32 %v247, %v472
  %s478 = scalar_lea.vmem %s1, 128
  %v479 = vld [vmem:[%s478] sm:$0xf]
  %v480 = vld [vmem:[%s478 + $0x4] sm:$0xf]
  %v481 = vld [vmem:[%s478 + $0x8] sm:$0xf]
  %v482 = vld [vmem:[%s478 + $0xc] sm:$0xf]
  %v483 = vld [vmem:[%s478 + $0x10] sm:$0xf]
  %v484 = vld [vmem:[%s478 + $0x14] sm:$0xf]
  %v485 = vld [vmem:[%s478 + $0x18] sm:$0xf]
  %v486 = vld [vmem:[%s478 + $0x1c] sm:$0xf]
  %v487 = vld [vmem:[%s478 + $0x20] sm:$0xf]
  %v488 = vld [vmem:[%s478 + $0x24] sm:$0xf]
  %v489 = vld [vmem:[%s478 + $0x28] sm:$0xf]
  %v490 = vld [vmem:[%s478 + $0x2c] sm:$0xf]
  %v491 = vld [vmem:[%s478 + $0x30] sm:$0xf]
  %v492 = vld [vmem:[%s478 + $0x34] sm:$0xf]
  %v493 = vld [vmem:[%s478 + $0x38] sm:$0xf]
  %v494 = vld [vmem:[%s478 + $0x3c] sm:$0xf]
  %s495 = scalar_lea.vmem %s2, 2
  %v496 = vld [vmem:[%s495] sm:$0x1]
  %v497 = vpack.c.bf16 %v477, %v477
  %v499 = vlaneseq
  %v500 = vshrl.u32 %v499, 7
  %v501 = vsub.s32 0, %v500
  %v502 = vrot.slane %v496, %v501
  %v520 = vunpack.c.l.b16 %v479
  %v521 = vunpack.c.l.b16 %v480
  %v522 = vunpack.c.l.b16 %v481
  %v523 = vunpack.c.l.b16 %v482
  %v524 = vunpack.c.l.b16 %v483
  %v525 = vunpack.c.l.b16 %v484
  %v526 = vunpack.c.l.b16 %v485
  %v527 = vunpack.c.l.b16 %v486
  %v528 = vunpack.c.l.b16 %v487
  %v529 = vunpack.c.l.b16 %v488
  %v530 = vunpack.c.l.b16 %v489
  %v531 = vunpack.c.l.b16 %v490
  %v532 = vunpack.c.l.b16 %v491
  %v533 = vunpack.c.l.b16 %v492
  %v534 = vunpack.c.l.b16 %v493
  %v535 = vunpack.c.l.b16 %v494
  %v536 = vpack.c.b16 %v521, %v520
  %v537 = vpack.c.b16 %v523, %v522
  %v538 = vpack.c.b16 %v525, %v524
  %v539 = vpack.c.b16 %v527, %v526
  %v540 = vpack.c.b16 %v529, %v528
  %v541 = vpack.c.b16 %v531, %v530
  %v542 = vpack.c.b16 %v533, %v532
  %v543 = vpack.c.b16 %v535, %v534
  %552 = vmatprep.subr.bf16.mxu0 0
  %553 = vmatpush1.bf16.msra.mxu0 %v536
  %554 = vmatprep.subr.bf16.mxu0 0
  %555 = vmatpush1.bf16.msra.mxu0 %v537
  %556 = vmatprep.subr.bf16.mxu0 0
  %557 = vmatpush1.bf16.msra.mxu0 %v538
  %558 = vmatprep.subr.bf16.mxu0 0
  %559 = vmatpush1.bf16.msra.mxu0 %v539
  %560 = vmatprep.subr.bf16.mxu0 0
  %561 = vmatpush1.bf16.msra.mxu0 %v540
  %562 = vmatprep.subr.bf16.mxu0 0
  %563 = vmatpush1.bf16.msra.mxu0 %v541
  %564 = vmatprep.subr.bf16.mxu0 0
  %565 = vmatpush1.bf16.msra.mxu0 %v542
  %566 = vmatprep.subr.bf16.mxu0 0
  %567 = vmatpush1.bf16.msra.mxu0 %v543
  %568 = vmatprep.subr.bf16.mxu0 0
  %569 = vmatpush1.bf16.msra.mxu0 0
  %570 = vmatprep.subr.bf16.mxu0 0
  %571 = vmatpush1.bf16.msra.mxu0 0
  %572 = vmatprep.subr.bf16.mxu0 0
  %573 = vmatpush1.bf16.msra.mxu0 0
  %574 = vmatprep.subr.bf16.mxu0 0
  %575 = vmatpush1.bf16.msra.mxu0 0
  %576 = vmatprep.subr.bf16.mxu0 0
  %577 = vmatpush1.bf16.msra.mxu0 0
  %578 = vmatprep.subr.bf16.mxu0 0
  %579 = vmatpush1.bf16.msra.mxu0 0
  %580 = vmatprep.subr.bf16.mxu0 0
  %581 = vmatpush1.bf16.msra.mxu0 0
  %582 = vmatprep.subr.bf16.mxu0 0
  %583 = vmatpush1.bf16.msra.mxu0 0
  %584 = vmatprep.mubr.bf16.mxu0 0
  %585 = vmatmul.mubr.bf16.gmra.mrb[0].mxu0 %v497
  %v586 = vpop.f32.mrb[0].mxu0
  %v587 = vadd.f32 %v502, %v586
  %v588 = vpop.f32.mrb[0].mxu0
  %v589 = vpop.f32.mrb[0].mxu0
  %v590 = vpop.f32.mrb[0].mxu0
  %591 = vdwg.mxu0
  %v592 = vmax.f32 %v587, 0.0
  %s593 = scalar_lea.vmem %s3, 128
  %v594 = vld [vmem:[%s593] sm:$0xf]
  %v595 = vld [vmem:[%s593 + $0x4] sm:$0xf]
  %v596 = vld [vmem:[%s593 + $0x8] sm:$0xf]
  %v597 = vld [vmem:[%s593 + $0xc] sm:$0xf]
  %v598 = vld [vmem:[%s593 + $0x10] sm:$0xf]
  %v599 = vld [vmem:[%s593 + $0x14] sm:$0xf]
  %v600 = vld [vmem:[%s593 + $0x18] sm:$0xf]
  %v601 = vld [vmem:[%s593 + $0x1c] sm:$0xf]
  %v602 = vld [vmem:[%s593 + $0x20] sm:$0xf]
  %v603 = vld [vmem:[%s593 + $0x24] sm:$0xf]
  %v604 = vld [vmem:[%s593 + $0x28] sm:$0xf]
  %v605 = vld [vmem:[%s593 + $0x2c] sm:$0xf]
  %v606 = vld [vmem:[%s593 + $0x30] sm:$0xf]
  %v607 = vld [vmem:[%s593 + $0x34] sm:$0xf]
  %v608 = vld [vmem:[%s593 + $0x38] sm:$0xf]
  %v609 = vld [vmem:[%s593 + $0x3c] sm:$0xf]
  %s610 = scalar_lea.vmem %s4, 2
  %v611 = vld [vmem:[%s610] sm:$0x1]
  %v612 = vpack.c.bf16 %v592, %v592
  %v614 = vlaneseq
  %v615 = vshrl.u32 %v614, 7
  %v616 = vsub.s32 0, %v615
  %v617 = vrot.slane %v611, %v616
  %v635 = vunpack.c.l.b16 %v594
  %v636 = vunpack.c.l.b16 %v595
  %v637 = vunpack.c.l.b16 %v596
  %v638 = vunpack.c.l.b16 %v597
  %v639 = vunpack.c.l.b16 %v598
  %v640 = vunpack.c.l.b16 %v599
  %v641 = vunpack.c.l.b16 %v600
  %v642 = vunpack.c.l.b16 %v601
  %v643 = vunpack.c.l.b16 %v602
  %v644 = vunpack.c.l.b16 %v603
  %v645 = vunpack.c.l.b16 %v604
  %v646 = vunpack.c.l.b16 %v605
  %v647 = vunpack.c.l.b16 %v606
  %v648 = vunpack.c.l.b16 %v607
  %v649 = vunpack.c.l.b16 %v608
  %v650 = vunpack.c.l.b16 %v609
  %v651 = vpack.c.b16 %v636, %v635
  %v652 = vpack.c.b16 %v638, %v637
  %v653 = vpack.c.b16 %v640, %v639
  %v654 = vpack.c.b16 %v642, %v641
  %v655 = vpack.c.b16 %v644, %v643
  %v656 = vpack.c.b16 %v646, %v645
  %v657 = vpack.c.b16 %v648, %v647
  %v658 = vpack.c.b16 %v650, %v649
  %667 = vmatprep.subr.bf16.mxu0 0
  %668 = vmatpush1.bf16.msra.mxu0 %v651
  %669 = vmatprep.subr.bf16.mxu0 0
  %670 = vmatpush1.bf16.msra.mxu0 %v652
  %671 = vmatprep.subr.bf16.mxu0 0
  %672 = vmatpush1.bf16.msra.mxu0 %v653
  %673 = vmatprep.subr.bf16.mxu0 0
  %674 = vmatpush1.bf16.msra.mxu0 %v654
  %675 = vmatprep.subr.bf16.mxu0 0
  %676 = vmatpush1.bf16.msra.mxu0 %v655
  %677 = vmatprep.subr.bf16.mxu0 0
  %678 = vmatpush1.bf16.msra.mxu0 %v656
  %679 = vmatprep.subr.bf16.mxu0 0
  %680 = vmatpush1.bf16.msra.mxu0 %v657
  %681 = vmatprep.subr.bf16.mxu0 0
  %682 = vmatpush1.bf16.msra.mxu0 %v658
  %683 = vmatprep.subr.bf16.mxu0 0
  %684 = vmatpush1.bf16.msra.mxu0 0
  %685 = vmatprep.subr.bf16.mxu0 0
  %686 = vmatpush1.bf16.msra.mxu0 0
  %687 = vmatprep.subr.bf16.mxu0 0
  %688 = vmatpush1.bf16.msra.mxu0 0
  %689 = vmatprep.subr.bf16.mxu0 0
  %690 = vmatpush1.bf16.msra.mxu0 0
  %691 = vmatprep.subr.bf16.mxu0 0
  %692 = vmatpush1.bf16.msra.mxu0 0
  %693 = vmatprep.subr.bf16.mxu0 0
  %694 = vmatpush1.bf16.msra.mxu0 0
  %695 = vmatprep.subr.bf16.mxu0 0
  %696 = vmatpush1.bf16.msra.mxu0 0
  %697 = vmatprep.subr.bf16.mxu0 0
  %698 = vmatpush1.bf16.msra.mxu0 0
  %699 = vmatprep.mubr.bf16.mxu0 0
  %700 = vmatmul.mubr.bf16.gmra.mrb[0].mxu0 %v612
  %v701 = vpop.f32.mrb[0].mxu0
  %v702 = vadd.f32 %v617, %v701
  %v703 = vpop.f32.mrb[0].mxu0
  %v704 = vpop.f32.mrb[0].mxu0
  %v705 = vpop.f32.mrb[0].mxu0
  %706 = vdwg.mxu0
  %v707 = vadd.f32 %v477, %v702
  %s708 = scalar_lea.vmem %s1, 192
  %v709 = vld [vmem:[%s708] sm:$0xf]
  %v710 = vld [vmem:[%s708 + $0x4] sm:$0xf]
  %v711 = vld [vmem:[%s708 + $0x8] sm:$0xf]
  %v712 = vld [vmem:[%s708 + $0xc] sm:$0xf]
  %v713 = vld [vmem:[%s708 + $0x10] sm:$0xf]
  %v714 = vld [vmem:[%s708 + $0x14] sm:$0xf]
  %v715 = vld [vmem:[%s708 + $0x18] sm:$0xf]
  %v716 = vld [vmem:[%s708 + $0x1c] sm:$0xf]
  %v717 = vld [vmem:[%s708 + $0x20] sm:$0xf]
  %v718 = vld [vmem:[%s708 + $0x24] sm:$0xf]
  %v719 = vld [vmem:[%s708 + $0x28] sm:$0xf]
  %v720 = vld [vmem:[%s708 + $0x2c] sm:$0xf]
  %v721 = vld [vmem:[%s708 + $0x30] sm:$0xf]
  %v722 = vld [vmem:[%s708 + $0x34] sm:$0xf]
  %v723 = vld [vmem:[%s708 + $0x38] sm:$0xf]
  %v724 = vld [vmem:[%s708 + $0x3c] sm:$0xf]
  %s725 = scalar_lea.vmem %s2, 3
  %v726 = vld [vmem:[%s725] sm:$0x1]
  %v727 = vpack.c.bf16 %v707, %v707
  %v729 = vlaneseq
  %v730 = vshrl.u32 %v729, 7
  %v731 = vsub.s32 0, %v730
  %v732 = vrot.slane %v726, %v731
  %v750 = vunpack.c.l.b16 %v709
  %v751 = vunpack.c.l.b16 %v710
  %v752 = vunpack.c.l.b16 %v711
  %v753 = vunpack.c.l.b16 %v712
  %v754 = vunpack.c.l.b16 %v713
  %v755 = vunpack.c.l.b16 %v714
  %v756 = vunpack.c.l.b16 %v715
  %v757 = vunpack.c.l.b16 %v716
  %v758 = vunpack.c.l.b16 %v717
  %v759 = vunpack.c.l.b16 %v718
  %v760 = vunpack.c.l.b16 %v719
  %v761 = vunpack.c.l.b16 %v720
  %v762 = vunpack.c.l.b16 %v721
  %v763 = vunpack.c.l.b16 %v722
  %v764 = vunpack.c.l.b16 %v723
  %v765 = vunpack.c.l.b16 %v724
  %v766 = vpack.c.b16 %v751, %v750
  %v767 = vpack.c.b16 %v753, %v752
  %v768 = vpack.c.b16 %v755, %v754
  %v769 = vpack.c.b16 %v757, %v756
  %v770 = vpack.c.b16 %v759, %v758
  %v771 = vpack.c.b16 %v761, %v760
  %v772 = vpack.c.b16 %v763, %v762
  %v773 = vpack.c.b16 %v765, %v764
  %782 = vmatprep.subr.bf16.mxu0 0
  %783 = vmatpush1.bf16.msra.mxu0 %v766
  %784 = vmatprep.subr.bf16.mxu0 0
  %785 = vmatpush1.bf16.msra.mxu0 %v767
  %786 = vmatprep.subr.bf16.mxu0 0
  %787 = vmatpush1.bf16.msra.mxu0 %v768
  %788 = vmatprep.subr.bf16.mxu0 0
  %789 = vmatpush1.bf16.msra.mxu0 %v769
  %790 = vmatprep.subr.bf16.mxu0 0
  %791 = vmatpush1.bf16.msra.mxu0 %v770
  %792 = vmatprep.subr.bf16.mxu0 0
  %793 = vmatpush1.bf16.msra.mxu0 %v771
  %794 = vmatprep.subr.bf16.mxu0 0
  %795 = vmatpush1.bf16.msra.mxu0 %v772
  %796 = vmatprep.subr.bf16.mxu0 0
  %797 = vmatpush1.bf16.msra.mxu0 %v773
  %798 = vmatprep.subr.bf16.mxu0 0
  %799 = vmatpush1.bf16.msra.mxu0 0
  %800 = vmatprep.subr.bf16.mxu0 0
  %801 = vmatpush1.bf16.msra.mxu0 0
  %802 = vmatprep.subr.bf16.mxu0 0
  %803 = vmatpush1.bf16.msra.mxu0 0
  %804 = vmatprep.subr.bf16.mxu0 0
  %805 = vmatpush1.bf16.msra.mxu0 0
  %806 = vmatprep.subr.bf16.mxu0 0
  %807 = vmatpush1.bf16.msra.mxu0 0
  %808 = vmatprep.subr.bf16.mxu0 0
  %809 = vmatpush1.bf16.msra.mxu0 0
  %810 = vmatprep.subr.bf16.mxu0 0
  %811 = vmatpush1.bf16.msra.mxu0 0
  %812 = vmatprep.subr.bf16.mxu0 0
  %813 = vmatpush1.bf16.msra.mxu0 0
  %814 = vmatprep.mubr.bf16.mxu0 0
  %815 = vmatmul.mubr.bf16.gmra.mrb[0].mxu0 %v727
  %v816 = vpop.f32.mrb[0].mxu0
  %v817 = vadd.f32 %v732, %v816
  %v818 = vpop.f32.mrb[0].mxu0
  %v819 = vpop.f32.mrb[0].mxu0
  %v820 = vpop.f32.mrb[0].mxu0
  %821 = vdwg.mxu0
  %v822 = vmax.f32 %v817, 0.0
  %s823 = scalar_lea.vmem %s3, 192
  %v824 = vld [vmem:[%s823] sm:$0xf]
  %v825 = vld [vmem:[%s823 + $0x4] sm:$0xf]
  %v826 = vld [vmem:[%s823 + $0x8] sm:$0xf]
  %v827 = vld [vmem:[%s823 + $0xc] sm:$0xf]
  %v828 = vld [vmem:[%s823 + $0x10] sm:$0xf]
  %v829 = vld [vmem:[%s823 + $0x14] sm:$0xf]
  %v830 = vld [vmem:[%s823 + $0x18] sm:$0xf]
  %v831 = vld [vmem:[%s823 + $0x1c] sm:$0xf]
  %v832 = vld [vmem:[%s823 + $0x20] sm:$0xf]
  %v833 = vld [vmem:[%s823 + $0x24] sm:$0xf]
  %v834 = vld [vmem:[%s823 + $0x28] sm:$0xf]
  %v835 = vld [vmem:[%s823 + $0x2c] sm:$0xf]
  %v836 = vld [vmem:[%s823 + $0x30] sm:$0xf]
  %v837 = vld [vmem:[%s823 + $0x34] sm:$0xf]
  %v838 = vld [vmem:[%s823 + $0x38] sm:$0xf]
  %v839 = vld [vmem:[%s823 + $0x3c] sm:$0xf]
  %s840 = scalar_lea.vmem %s4, 3
  %v841 = vld [vmem:[%s840] sm:$0x1]
  %v842 = vpack.c.bf16 %v822, %v822
  %v844 = vlaneseq
  %v845 = vshrl.u32 %v844, 7
  %v846 = vsub.s32 0, %v845
  %v847 = vrot.slane %v841, %v846
  %v865 = vunpack.c.l.b16 %v824
  %v866 = vunpack.c.l.b16 %v825
  %v867 = vunpack.c.l.b16 %v826
  %v868 = vunpack.c.l.b16 %v827
  %v869 = vunpack.c.l.b16 %v828
  %v870 = vunpack.c.l.b16 %v829
  %v871 = vunpack.c.l.b16 %v830
  %v872 = vunpack.c.l.b16 %v831
  %v873 = vunpack.c.l.b16 %v832
  %v874 = vunpack.c.l.b16 %v833
  %v875 = vunpack.c.l.b16 %v834
  %v876 = vunpack.c.l.b16 %v835
  %v877 = vunpack.c.l.b16 %v836
  %v878 = vunpack.c.l.b16 %v837
  %v879 = vunpack.c.l.b16 %v838
  %v880 = vunpack.c.l.b16 %v839
  %v881 = vpack.c.b16 %v866, %v865
  %v882 = vpack.c.b16 %v868, %v867
  %v883 = vpack.c.b16 %v870, %v869
  %v884 = vpack.c.b16 %v872, %v871
  %v885 = vpack.c.b16 %v874, %v873
  %v886 = vpack.c.b16 %v876, %v875
  %v887 = vpack.c.b16 %v878, %v877
  %v888 = vpack.c.b16 %v880, %v879
  %897 = vmatprep.subr.bf16.mxu0 0
  %898 = vmatpush1.bf16.msra.mxu0 %v881
  %899 = vmatprep.subr.bf16.mxu0 0
  %900 = vmatpush1.bf16.msra.mxu0 %v882
  %901 = vmatprep.subr.bf16.mxu0 0
  %902 = vmatpush1.bf16.msra.mxu0 %v883
  %903 = vmatprep.subr.bf16.mxu0 0
  %904 = vmatpush1.bf16.msra.mxu0 %v884
  %905 = vmatprep.subr.bf16.mxu0 0
  %906 = vmatpush1.bf16.msra.mxu0 %v885
  %907 = vmatprep.subr.bf16.mxu0 0
  %908 = vmatpush1.bf16.msra.mxu0 %v886
  %909 = vmatprep.subr.bf16.mxu0 0
  %910 = vmatpush1.bf16.msra.mxu0 %v887
  %911 = vmatprep.subr.bf16.mxu0 0
  %912 = vmatpush1.bf16.msra.mxu0 %v888
  %913 = vmatprep.subr.bf16.mxu0 0
  %914 = vmatpush1.bf16.msra.mxu0 0
  %915 = vmatprep.subr.bf16.mxu0 0
  %916 = vmatpush1.bf16.msra.mxu0 0
  %917 = vmatprep.subr.bf16.mxu0 0
  %918 = vmatpush1.bf16.msra.mxu0 0
  %919 = vmatprep.subr.bf16.mxu0 0
  %920 = vmatpush1.bf16.msra.mxu0 0
  %921 = vmatprep.subr.bf16.mxu0 0
  %922 = vmatpush1.bf16.msra.mxu0 0
  %923 = vmatprep.subr.bf16.mxu0 0
  %924 = vmatpush1.bf16.msra.mxu0 0
  %925 = vmatprep.subr.bf16.mxu0 0
  %926 = vmatpush1.bf16.msra.mxu0 0
  %927 = vmatprep.subr.bf16.mxu0 0
  %928 = vmatpush1.bf16.msra.mxu0 0
  %929 = vmatprep.mubr.bf16.mxu0 0
  %930 = vmatmul.mubr.bf16.gmra.mrb[0].mxu0 %v842
  %v931 = vpop.f32.mrb[0].mxu0
  %v932 = vadd.f32 %v847, %v931
  %v933 = vpop.f32.mrb[0].mxu0
  %v934 = vpop.f32.mrb[0].mxu0
  %v935 = vpop.f32.mrb[0].mxu0
  %936 = vdwg.mxu0
  %v937 = vadd.f32 %v707, %v932
  %938 = vst [vmem:[%s5] sm:$0xff] %v937
  // Predicated region
  $region22: #{flownet_forward.1} parent=0 // pred_check
    _
  $region23: #{flownet_forward.1} parent=0 // pred_check_branch
    %940 = sbr.rel (0) target = $region25
  $region24: #{flownet_forward.1} parent=0 // pred_region
    _
  $region25: #{flownet_forward.1} parent=0 // pred_fallthru
    _
  // Predicated region
  $region26: #{flownet_forward.1} parent=0 // pred_check
    _
  $region27: #{flownet_forward.1} parent=0 // pred_check_branch
    %942 = sbr.rel (0) target = $region29
  $region28: #{flownet_forward.1} parent=0 // pred_region
    _
  $region29: #{flownet_forward.1} parent=0 // pred_fallthru
    _

</llo_original>
